<compile_context>
chip_gen: v7x
topology: tpu7x:2x2x1
jax: 0.10.0
libtpu: 0.0.40
codegen_flags: <defaults>
</compile_context>

<pallas_src>
import math
import numpy as np
import jax
import jax.numpy as jnp
from jax.experimental import pallas as pl
from jax.experimental.pallas import tpu as pltpu


# ----------------------------------------------------------------------------
# Fused DASI kernel: every block is (channels, lane_tile) with lanes = spatial.
# ----------------------------------------------------------------------------
def _dasi_fused_kernel(xcat_ref, xlh_ref, bw_ref,
                       wst_ref, bst_ref, w2_ref, b2_ref,
                       wtl_ref, ctl_ref, bns_ref, o_ref):
    f32 = jnp.float32
    cout = o_ref.shape[1]

    # (1) skips (1x1) + skips_3 (3x3 s2 d2, 9-tap) fused into ONE block-diagonal
    #     MXU matmul on the host-concatenated bf16 operand.
    r = jnp.dot(wst_ref[...], xcat_ref[0], preferred_element_type=f32) + bst_ref[...]
    xs = r[:cout]              # skips(x)  (== x_skip, also drives the sigmoid gate)
    hi = r[cout:]              # skips_3(x_high)

    # (2) low branch: skips_2 (1x1) on the host h-interpolated x_low, then the
    #     width interpolation as a small loop-invariant block-diag matmul
    #     kron(I_rh, A_w^T).  b2 is added after the interp (interp rows sum to 1).
    m = jnp.dot(w2_ref[...], xlh_ref[0], preferred_element_type=f32)
    lo = jnp.dot(m.astype(bw_ref.dtype), bw_ref[...],
                 preferred_element_type=f32) + b2_ref[...]

    # (3) Bag: chunk/cat over channels == plain elementwise gating.
    #     (kept f32: v5e VPU has no bf16; on v6e/v7x this chain could run bf16)
    edge = jax.nn.sigmoid(xs)
    bag = edge * lo + (1.0 - edge) * hi

    # (4) tail_conv (1x1, BN scale pre-folded) + bn_scale*x_skip + shift, ReLU.
    y = jnp.dot(wtl_ref[...], bag.astype(wtl_ref.dtype),
                preferred_element_type=f32) + ctl_ref[...]
    o_ref[0] = jnp.maximum(y + bns_ref[...] * xs, 0.0)


def _pick_row_tile(H, W, cap_lanes=1024):
    """Rows per spatial tile.  Lane tile t = rh*W must be a multiple of 128 and
    <= cap_lanes (VMEM budget on v5e/v7x); falls back to the full extent."""
    best = None
    for rh in range(1, H + 1):
        if H % rh:
            continue
        t = rh * W
        if t > cap_lanes:
            break
        if t % 128 == 0:
            best = rh
    # TODO(synk): when H*W is not a multiple of 128 this falls back to one
    #             full-extent (masked-store) spatial block; padding HW up to 128
    #             and trimming the output would keep stores lane-dense.
    return best if best is not None else H


def _interp_matrix_np(out_size, in_size):
    """Row-interpolation matrix for bilinear resize, align_corners=True (numpy)."""
    if out_size == 1:
        src = np.zeros((1,), np.float64)
    else:
        src = np.arange(out_size, dtype=np.float64) * (in_size - 1) / (out_size - 1)
    i0 = np.clip(np.floor(src).astype(np.int64), 0, in_size - 1)
    i1 = np.clip(i0 + 1, 0, in_size - 1)
    w1 = src - i0
    w0 = 1.0 - w1
    A = np.zeros((out_size, in_size), np.float32)
    idx = np.arange(out_size)
    A[idx, i0] += w0
    A[idx, i1] += w1
    return A


# ----------------------------------------------------------------------------
# DASI forward (thin XLA glue: reshapes, bf16 casts, tiny host h-interp, consts)
# ----------------------------------------------------------------------------
def dasi_forward(x, x_low, x_high, params, *, cap_lanes=1024):
    N, Cin, H, W = x.shape
    HW = H * W
    Cout = params["w_skips"].shape[0]
    Cin2 = params["w_skips3"].shape[1]
    _, C2, Hl, Wl = x_low.shape
    mmdt = jnp.bfloat16

    # ---- spatial row tiling --------------------------------------------------
    rh = _pick_row_tile(H, W, cap_lanes)
    t = rh * W
    S = H // rh
    if rh == H:
        Wl_p = Wl                               # full-extent blocks, exempt
    else:
        g = 128 // math.gcd(rh, 128)            # need (rh * Wl_p) % 128 == 0
        Wl_p = ((Wl + g - 1) // g) * g

    # ---- high branch: pad 2, stride-2/dilation-2 conv only touches EVEN padded
    # indices -> subsample once, 9 unit-stride taps, fused with x into one bf16
    # operand for the block-diagonal stacked matmul. -----------------------------
    Hh, Wh = x_high.shape[2], x_high.shape[3]
    Ho, Wo = (Hh - 1) // 2 + 1, (Wh - 1) // 2 + 1
    assert (Ho, Wo) == (H, W), "skips_3(x_high) must match x's spatial size"
    xp = jnp.pad(x_high, ((0, 0), (0, 0), (2, 2), (2, 2)))
    xe = xp[:, :, 0::2, 0::2]                                   # (N, Cin2, H+2, W+2)
    taps = jnp.concatenate(
        [xe[:, :, kh:kh + H, kw:kw + W] for kh in range(3) for kw in range(3)],
        axis=1).reshape(N, 9 * Cin2, HW)
    xcat = jnp.concatenate([x.reshape(N, Cin, HW), taps], axis=1).astype(mmdt)
    Kc = Cin + 9 * Cin2

    # stacked block-diagonal weight -> xs and hi from a single MXU call
    w3f = jnp.transpose(params["w_skips3"], (0, 2, 3, 1)).reshape(Cout, 9 * Cin2)
    w_top = jnp.concatenate([params["w_skips"],
                             jnp.zeros((Cout, 9 * Cin2), jnp.float32)], axis=1)
    w_bot = jnp.concatenate([jnp.zeros((Cout, Cin), jnp.float32), w3f], axis=1)
    w_stack = jnp.concatenate([w_top, w_bot], axis=0).astype(mmdt)
    b_stack = jnp.concatenate([params["b_skips"], params["b_skips3"]]).reshape(-1, 1)

    # ---- low branch: 2-tap h-interp on the host (raw x_low, tiny), flattened ---
    A_h = jnp.asarray(_interp_matrix_np(H, Hl))
    xlh = jnp.einsum("hp,ncpq->nchq", A_h, x_low)               # (N, C2, H, Wl)
    if Wl_p > Wl:
        xlh = jnp.pad(xlh, ((0, 0), (0, 0), (0, 0), (0, Wl_p - Wl)))
    xlh = xlh.reshape(N, C2, H * Wl_p).astype(mmdt)

    # in-kernel w-interp matrix: block-diagonal kron(I_rh, A_w^T), identical for
    # every grid step -> DMA'd once, stays resident.
    A_w = _interp_matrix_np(W, Wl)
    A_wp = np.zeros((W, Wl_p), np.float32)
    A_wp[:, :Wl] = A_w
    BW = jnp.asarray(np.kron(np.eye(rh, dtype=np.float32), A_wp.T), mmdt)

    # ---- fold BatchNorm (eval) into the tail conv ------------------------------
    eps = 1e-5
    bn_scale = params["bn_gamma"] / jnp.sqrt(params["bn_var"] + eps)
    bn_shift = params["bn_beta"] - params["bn_mean"] * bn_scale
    w_tail_f = (params["w_tail"] * bn_scale[:, None]).astype(mmdt)
    c_tail = (params["b_tail"] * bn_scale + bn_shift).reshape(-1, 1)

    w2 = params["w_skips2"].astype(mmdt)
    b2 = params["b_skips2"].reshape(-1, 1)
    bns = bn_scale.reshape(-1, 1)

    grid = (S, N)                       # spatial outer, batch inner (review #4)

    out_flat = pl.pallas_call(
        _dasi_fused_kernel,
        out_shape=jax.ShapeDtypeStruct((N, Cout, HW), jnp.float32),
        grid=grid,
        in_specs=[
            pl.BlockSpec((1, Kc, t),          lambda s, n: (n, 0, s)),   # x||taps  bf16
            pl.BlockSpec((1, C2, rh * Wl_p),  lambda s, n: (n, 0, s)),   # xlh      bf16
            pl.BlockSpec((rh * Wl_p, t),      lambda s, n: (0, 0)),      # w-interp bf16
            pl.BlockSpec((2 * Cout, Kc),      lambda s, n: (0, 0)),      # w_stack  bf16
            pl.BlockSpec((2 * Cout, 1),       lambda s, n: (0, 0)),      # b_stack
            pl.BlockSpec((Cout, C2),          lambda s, n: (0, 0)),      # w_skips2 bf16
            pl.BlockSpec((Cout, 1),           lambda s, n: (0, 0)),      # b_skips2
            pl.BlockSpec((Cout, Cout),        lambda s, n: (0, 0)),      # w_tail*bn bf16
            pl.BlockSpec((Cout, 1),           lambda s, n: (0, 0)),      # folded tail bias
            pl.BlockSpec((Cout, 1),           lambda s, n: (0, 0)),      # bn scale
        ],
        out_specs=pl.BlockSpec((1, Cout, t),  lambda s, n: (n, 0, s)),
        compiler_params=pltpu.CompilerParams(
            dimension_semantics=("parallel", "parallel")),
    )(xcat, xlh, BW, w_stack, b_stack, w2, b2, w_tail_f, c_tail, bns)

    return out_flat.reshape(N, Cout, H, W)


# ----------------------------------------------------------------------------
# Deterministic parameter init (shapes from DASI.__init__, channels-first)
# ----------------------------------------------------------------------------
def init_params(key, in_features, out_features):
    ks = jax.random.split(key, 8)
    rnd = lambda k, s: jax.random.normal(k, s, jnp.float32) * 0.1
    cin2 = in_features // 2
    return {
        "w_skips":  rnd(ks[0], (out_features, in_features)),          # 1x1
        "b_skips":  rnd(ks[1], (out_features,)),
        "w_skips2": rnd(ks[2], (out_features, in_features * 2)),      # 1x1
        "b_skips2": rnd(ks[3], (out_features,)),
        "w_skips3": rnd(ks[4], (out_features, cin2, 3, 3)),           # OIHW
        "b_skips3": rnd(ks[5], (out_features,)),
        "w_tail":   rnd(ks[6], (out_features, out_features)),         # 1x1
        "b_tail":   rnd(ks[7], (out_features,)),
        # BatchNorm2d(out_features): default affine + running stats (eval)
        "bn_gamma": jnp.ones((out_features,), jnp.float32),
        "bn_beta":  jnp.zeros((out_features,), jnp.float32),
        "bn_mean":  jnp.zeros((out_features,), jnp.float32),
        "bn_var":   jnp.ones((out_features,), jnp.float32),
    }


# ----------------------------------------------------------------------------
# Pure-JAX reference (for correctness check)
# ----------------------------------------------------------------------------
def reference_forward(x, x_low, x_high, params):
    N, Cin, H, W = x.shape
    hi = jax.lax.conv_general_dilated(
        x_high, params["w_skips3"], window_strides=(2, 2),
        padding=((2, 2), (2, 2)), rhs_dilation=(2, 2),
        dimension_numbers=("NCHW", "OIHW", "NCHW")) \
        + params["b_skips3"][None, :, None, None]
    lo = jnp.einsum("oc,nchw->nohw", params["w_skips2"], x_low) \
        + params["b_skips2"][None, :, None, None]
    A_h = jnp.asarray(_interp_matrix_np(H, lo.shape[2]))
    A_w = jnp.asarray(_interp_matrix_np(W, lo.shape[3]))
    lo = jnp.einsum("ip,ncpw->nciw", A_h, lo)
    lo = jnp.einsum("jq,nciq->ncij", A_w, lo)
    xs = jnp.einsum("oc,nchw->nohw", params["w_skips"], x) \
        + params["b_skips"][None, :, None, None]
    edge = jax.nn.sigmoid(xs)
    bag = edge * lo + (1.0 - edge) * hi
    tail = jnp.einsum("od,ndhw->nohw", params["w_tail"], bag) \
        + params["b_tail"][None, :, None, None]
    y = tail + xs
    eps = 1e-5
    scale = params["bn_gamma"] / jnp.sqrt(params["bn_var"] + eps)
    shift = params["bn_beta"] - params["bn_mean"] * scale
    y = y * scale[None, :, None, None] + shift[None, :, None, None]
    return jnp.maximum(y, 0.0)


# ----------------------------------------------------------------------------
if __name__ == "__main__":
    in_features, out_features = 8, 8
    N, H, W = 2, 16, 16

    key = jax.random.PRNGKey(0)
    k1, k2, k3, kp = jax.random.split(key, 4)
    x = jax.random.normal(k1, (N, in_features, H, W), jnp.float32)
    x_low = jax.random.normal(k2, (N, in_features * 2, H // 2, W // 2), jnp.float32)
    x_high = jax.random.normal(k3, (N, in_features // 2, 2 * H, 2 * W), jnp.float32)
    params = init_params(kp, in_features, out_features)

    fwd = jax.jit(dasi_forward)
    out = jax.block_until_ready(fwd(x, x_low, x_high, params))
    assert out.shape == (N, out_features, H, W)

    ref = reference_forward(x, x_low, x_high, params)
    np.testing.assert_allclose(np.asarray(out), np.asarray(ref),
                               rtol=5e-2, atol=5e-2)
    print("KERNEL_OK")
</pallas_src>

<mosaic_0001>
module attributes {stable_mosaic.version = 11 : i64} {
  func.func @_dasi_fused_kernel(%arg0: i32, %arg1: i32, %arg2: memref<1x44x256xbf16, #tpu.memory_space<vmem>>, %arg3: memref<1x16x128xbf16, #tpu.memory_space<vmem>>, %arg4: memref<128x256xbf16, #tpu.memory_space<vmem>>, %arg5: memref<16x44xbf16, #tpu.memory_space<vmem>>, %arg6: memref<16x1xf32, #tpu.memory_space<vmem>>, %arg7: memref<8x16xbf16, #tpu.memory_space<vmem>>, %arg8: memref<8x1xf32, #tpu.memory_space<vmem>>, %arg9: memref<8x8xbf16, #tpu.memory_space<vmem>>, %arg10: memref<8x1xf32, #tpu.memory_space<vmem>>, %arg11: memref<8x1xf32, #tpu.memory_space<vmem>>, %arg12: memref<1x8x256xf32, #tpu.memory_space<vmem>>) attributes {dimension_semantics = [#tpu.dimension_semantics<parallel>, #tpu.dimension_semantics<parallel>], iteration_bounds = array<i64: 1, 2>, scalar_prefetch = 0 : i64, scratch_operands = 0 : i64, tpu.core_type = #tpu.core_type<tc>, window_params = [{transform_indices = @transform_0, window_bounds = array<i64: 1, 44, 256>}, {transform_indices = @transform_1, window_bounds = array<i64: 1, 16, 128>}, {pipeline_mode = #tpu.pipeline_mode<synchronous>, transform_indices = @transform_2, window_bounds = array<i64: 128, 256>}, {pipeline_mode = #tpu.pipeline_mode<synchronous>, transform_indices = @transform_3, window_bounds = array<i64: 16, 44>}, {pipeline_mode = #tpu.pipeline_mode<synchronous>, transform_indices = @transform_4, window_bounds = array<i64: 16, 1>}, {pipeline_mode = #tpu.pipeline_mode<synchronous>, transform_indices = @transform_5, window_bounds = array<i64: 8, 16>}, {pipeline_mode = #tpu.pipeline_mode<synchronous>, transform_indices = @transform_6, window_bounds = array<i64: 8, 1>}, {pipeline_mode = #tpu.pipeline_mode<synchronous>, transform_indices = @transform_7, window_bounds = array<i64: 8, 8>}, {pipeline_mode = #tpu.pipeline_mode<synchronous>, transform_indices = @transform_8, window_bounds = array<i64: 8, 1>}, {pipeline_mode = #tpu.pipeline_mode<synchronous>, transform_indices = @transform_9, window_bounds = array<i64: 8, 1>}, {transform_indices = @transform_10, window_bounds = array<i64: 1, 8, 256>}]} {
    %c0 = arith.constant 0 : index
    %c0_0 = arith.constant 0 : index
    %0 = vector.load %arg5[%c0, %c0_0] : memref<16x44xbf16, #tpu.memory_space<vmem>>, vector<16x44xbf16>
    %c0_1 = arith.constant 0 : index
    %c0_2 = arith.constant 0 : index
    %c0_3 = arith.constant 0 : index
    %1 = vector.load %arg2[%c0_1, %c0_2, %c0_3] : memref<1x44x256xbf16, #tpu.memory_space<vmem>>, vector<1x44x256xbf16>
    %2 = vector.shape_cast %1 : vector<1x44x256xbf16> to vector<44x256xbf16>
    %cst = arith.constant dense<0.000000e+00> : vector<16x256xf32>
    %3 = tpu.matmul %0, %2, %cst {dimension_numbers = #tpu.dot_dimension_numbers<[1], [0], [0], [1], [0, 0, 1, 1], [], []>} : vector<16x44xbf16>, vector<44x256xbf16>, vector<16x256xf32> -> vector<16x256xf32>
    %c0_4 = arith.constant 0 : index
    %c0_5 = arith.constant 0 : index
    %4 = vector.load %arg6[%c0_4, %c0_5] : memref<16x1xf32, #tpu.memory_space<vmem>>, vector<16x1xf32>
    %5 = vector.broadcast %4 : vector<16x1xf32> to vector<16x256xf32>
    %6 = arith.addf %3, %5 : vector<16x256xf32>
    %7 = vector.extract_strided_slice %6 {offsets = [0, 0], sizes = [8, 256], strides = [1, 1]} : vector<16x256xf32> to vector<8x256xf32>
    %8 = vector.extract_strided_slice %6 {offsets = [8, 0], sizes = [8, 256], strides = [1, 1]} : vector<16x256xf32> to vector<8x256xf32>
    %c0_6 = arith.constant 0 : index
    %c0_7 = arith.constant 0 : index
    %9 = vector.load %arg7[%c0_6, %c0_7] : memref<8x16xbf16, #tpu.memory_space<vmem>>, vector<8x16xbf16>
    %c0_8 = arith.constant 0 : index
    %c0_9 = arith.constant 0 : index
    %c0_10 = arith.constant 0 : index
    %10 = vector.load %arg3[%c0_8, %c0_9, %c0_10] : memref<1x16x128xbf16, #tpu.memory_space<vmem>>, vector<1x16x128xbf16>
    %11 = vector.shape_cast %10 : vector<1x16x128xbf16> to vector<16x128xbf16>
    %cst_11 = arith.constant dense<0.000000e+00> : vector<8x128xf32>
    %12 = tpu.matmul %9, %11, %cst_11 {dimension_numbers = #tpu.dot_dimension_numbers<[1], [0], [0], [1], [0, 0, 1, 1], [], []>} : vector<8x16xbf16>, vector<16x128xbf16>, vector<8x128xf32> -> vector<8x128xf32>
    %13 = arith.truncf %12 : vector<8x128xf32> to vector<8x128xbf16>
    %c0_12 = arith.constant 0 : index
    %c0_13 = arith.constant 0 : index
    %14 = vector.load %arg4[%c0_12, %c0_13] : memref<128x256xbf16, #tpu.memory_space<vmem>>, vector<128x256xbf16>
    %cst_14 = arith.constant dense<0.000000e+00> : vector<8x256xf32>
    %15 = tpu.matmul %13, %14, %cst_14 {dimension_numbers = #tpu.dot_dimension_numbers<[1], [0], [0], [1], [0, 0, 1, 1], [], []>} : vector<8x128xbf16>, vector<128x256xbf16>, vector<8x256xf32> -> vector<8x256xf32>
    %c0_15 = arith.constant 0 : index
    %c0_16 = arith.constant 0 : index
    %16 = vector.load %arg8[%c0_15, %c0_16] : memref<8x1xf32, #tpu.memory_space<vmem>>, vector<8x1xf32>
    %17 = vector.broadcast %16 : vector<8x1xf32> to vector<8x256xf32>
    %18 = arith.addf %15, %17 : vector<8x256xf32>
    %19 = arith.negf %7 : vector<8x256xf32>
    %20 = math.exp %19 : vector<8x256xf32>
    %cst_17 = arith.constant 1.000000e+00 : f32
    %21 = vector.broadcast %cst_17 : f32 to vector<8x256xf32>
    %22 = arith.addf %21, %20 : vector<8x256xf32>
    %23 = arith.divf %21, %22 : vector<8x256xf32>
    %24 = arith.mulf %23, %18 : vector<8x256xf32>
    %cst_18 = arith.constant 1.000000e+00 : f32
    %25 = vector.broadcast %cst_18 : f32 to vector<8x256xf32>
    %26 = arith.subf %25, %23 : vector<8x256xf32>
    %27 = arith.mulf %26, %8 : vector<8x256xf32>
    %28 = arith.addf %24, %27 : vector<8x256xf32>
    %c0_19 = arith.constant 0 : index
    %c0_20 = arith.constant 0 : index
    %29 = vector.load %arg9[%c0_19, %c0_20] : memref<8x8xbf16, #tpu.memory_space<vmem>>, vector<8x8xbf16>
    %30 = arith.truncf %28 : vector<8x256xf32> to vector<8x256xbf16>
    %cst_21 = arith.constant dense<0.000000e+00> : vector<8x256xf32>
    %31 = tpu.matmul %29, %30, %cst_21 {dimension_numbers = #tpu.dot_dimension_numbers<[1], [0], [0], [1], [0, 0, 1, 1], [], []>} : vector<8x8xbf16>, vector<8x256xbf16>, vector<8x256xf32> -> vector<8x256xf32>
    %c0_22 = arith.constant 0 : index
    %c0_23 = arith.constant 0 : index
    %32 = vector.load %arg10[%c0_22, %c0_23] : memref<8x1xf32, #tpu.memory_space<vmem>>, vector<8x1xf32>
    %33 = vector.broadcast %32 : vector<8x1xf32> to vector<8x256xf32>
    %34 = arith.addf %31, %33 : vector<8x256xf32>
    %c0_24 = arith.constant 0 : index
    %c0_25 = arith.constant 0 : index
    %35 = vector.load %arg11[%c0_24, %c0_25] : memref<8x1xf32, #tpu.memory_space<vmem>>, vector<8x1xf32>
    %36 = vector.broadcast %35 : vector<8x1xf32> to vector<8x256xf32>
    %37 = arith.mulf %36, %7 : vector<8x256xf32>
    %38 = arith.addf %34, %37 : vector<8x256xf32>
    %cst_26 = arith.constant 0.000000e+00 : f32
    %39 = vector.broadcast %cst_26 : f32 to vector<8x256xf32>
    %40 = arith.maximumf %38, %39 : vector<8x256xf32>
    %c0_27 = arith.constant 0 : index
    %c0_28 = arith.constant 0 : index
    %c0_29 = arith.constant 0 : index
    %41 = vector.load %arg12[%c0_27, %c0_28, %c0_29] : memref<1x8x256xf32, #tpu.memory_space<vmem>>, vector<1x8x256xf32>
    %42 = vector.shape_cast %41 : vector<1x8x256xf32> to vector<8x256xf32>
    %43 = vector.shape_cast %40 : vector<8x256xf32> to vector<1x8x256xf32>
    tpu.vector_store %arg12[%c0_27, %c0_28, %c0_29], %43 {strides = array<i32>} : memref<1x8x256xf32, #tpu.memory_space<vmem>>, vector<1x8x256xf32>,
    return
  }
  func.func @transform_0(%arg0: i32, %arg1: i32) -> (i32, i32, i32) {
    %c0_i32 = arith.constant 0 : i32
    %c0_i32_0 = arith.constant 0 : i32
    return %arg1, %c0_i32, %arg0 : i32, i32, i32
  }
  func.func @transform_1(%arg0: i32, %arg1: i32) -> (i32, i32, i32) {
    %c0_i32 = arith.constant 0 : i32
    %c0_i32_0 = arith.constant 0 : i32
    return %arg1, %c0_i32, %arg0 : i32, i32, i32
  }
  func.func @transform_2(%arg0: i32, %arg1: i32) -> (i32, i32) {
    %c0_i32 = arith.constant 0 : i32
    %c0_i32_0 = arith.constant 0 : i32
    %c0_i32_1 = arith.constant 0 : i32
    return %c0_i32, %c0_i32_0 : i32, i32
  }
  func.func @transform_3(%arg0: i32, %arg1: i32) -> (i32, i32) {
    %c0_i32 = arith.constant 0 : i32
    %c0_i32_0 = arith.constant 0 : i32
    %c0_i32_1 = arith.constant 0 : i32
    return %c0_i32, %c0_i32_0 : i32, i32
  }
  func.func @transform_4(%arg0: i32, %arg1: i32) -> (i32, i32) {
    %c0_i32 = arith.constant 0 : i32
    %c0_i32_0 = arith.constant 0 : i32
    %c0_i32_1 = arith.constant 0 : i32
    return %c0_i32, %c0_i32_0 : i32, i32
  }
  func.func @transform_5(%arg0: i32, %arg1: i32) -> (i32, i32) {
    %c0_i32 = arith.constant 0 : i32
    %c0_i32_0 = arith.constant 0 : i32
    %c0_i32_1 = arith.constant 0 : i32
    return %c0_i32, %c0_i32_0 : i32, i32
  }
  func.func @transform_6(%arg0: i32, %arg1: i32) -> (i32, i32) {
    %c0_i32 = arith.constant 0 : i32
    %c0_i32_0 = arith.constant 0 : i32
    %c0_i32_1 = arith.constant 0 : i32
    return %c0_i32, %c0_i32_0 : i32, i32
  }
  func.func @transform_7(%arg0: i32, %arg1: i32) -> (i32, i32) {
    %c0_i32 = arith.constant 0 : i32
    %c0_i32_0 = arith.constant 0 : i32
    %c0_i32_1 = arith.constant 0 : i32
    return %c0_i32, %c0_i32_0 : i32, i32
  }
  func.func @transform_8(%arg0: i32, %arg1: i32) -> (i32, i32) {
    %c0_i32 = arith.constant 0 : i32
    %c0_i32_0 = arith.constant 0 : i32
    %c0_i32_1 = arith.constant 0 : i32
    return %c0_i32, %c0_i32_0 : i32, i32
  }
  func.func @transform_9(%arg0: i32, %arg1: i32) -> (i32, i32) {
    %c0_i32 = arith.constant 0 : i32
    %c0_i32_0 = arith.constant 0 : i32
    %c0_i32_1 = arith.constant 0 : i32
    return %c0_i32, %c0_i32_0 : i32, i32
  }
  func.func @transform_10(%arg0: i32, %arg1: i32) -> (i32, i32, i32) {
    %c0_i32 = arith.constant 0 : i32
    %c0_i32_0 = arith.constant 0 : i32
    return %arg1, %c0_i32, %arg0 : i32, i32, i32
  }
}

</mosaic_0001>

<llo_original>
// kernel: dasi_forward.1
$region0: #{dasi_forward.1}
  #allocation0 [shape = 'u32[]', space=smem, size = 0x4, offset = 0x4, fixed_abs, tag = 'smem constant byte address 0x4 - core index']
  #allocation1 [shape = 'u32[144,128]{1,0:T(1,128)}', space=vmem, size = 0x12000, scoped, tag = 'internal scratch']
  %s0 = inlined_call_operand.vmem [shape: bf16[2,44,256], index: 0, kind: input, shape index: {}]
  %s1 = inlined_call_operand.vmem [shape: bf16[2,16,128], index: 1, kind: input, shape index: {}]
  %s2 = inlined_call_operand.vmem [shape: bf16[128,256], index: 2, kind: input, shape index: {}]
  %s3 = inlined_call_operand.vmem [shape: bf16[16,44], index: 3, kind: input, shape index: {}]
  %s4 = inlined_call_operand.vmem [shape: f32[16,1], index: 4, kind: input, shape index: {}]
  %s5 = inlined_call_operand.vmem [shape: bf16[8,16], index: 5, kind: input, shape index: {}]
  %s6 = inlined_call_operand.vmem [shape: f32[8,1], index: 6, kind: input, shape index: {}]
  %s7 = inlined_call_operand.vmem [shape: bf16[8,8], index: 7, kind: input, shape index: {}]
  %s8 = inlined_call_operand.vmem [shape: f32[8,1], index: 8, kind: input, shape index: {}]
  %s9 = inlined_call_operand.vmem [shape: f32[8,1], index: 9, kind: input, shape index: {}]
  %s10 = inlined_call_operand.vmem [shape: f32[2,8,256], index: 10, kind: output, shape index: {}]
  %s11 = sld [smem:[#allocation0]]
  $region73: #{dasi_forward.1} parent=0
    _
  %s13 = ssub.s32 1, %s11
  %s14 = scalar_select 0, %s13, %s11
  loop: start=0, step=1, limit=4
  $region2: #{dasi_forward.1} parent=0 // loop_pre_header
    _
  $region3: #{dasi_forward.1} parent=0 // loop_header
    %s16 = sphi 0, %s20
    %p17 = scmp.ge.s32.totalorder %s16, 4
    %s23 = sphi 0, %s35
    %s24 = sphi 0, %s31
    %s25 = sphi 0, %s23
    %s26 = sphi 0, %s24
    %s27 = sphi 0, %s25
    %s28 = sphi 0, %s26
    %s40 = sphi 0, %s42
    %s43 = sphi 0, %s40
    %s44 = sphi 0, %s43
    %s60 = sphi 0, %s44
    %s68 = sphi 0, %s70
    %s71 = sphi 0, %s68
    %s72 = sphi 0, %s71
    %s88 = sphi 0, %s72
    %s92 = sphi 0, %s92
    %s94 = sphi 0, %s92
    %s95 = sphi 0, %s94
    %s109 = sphi 0, %s95
    %s113 = sphi 0, %s113
    %s115 = sphi 0, %s113
    %s116 = sphi 0, %s115
    %s130 = sphi 0, %s116
    %s134 = sphi 0, %s134
    %s136 = sphi 0, %s134
    %s137 = sphi 0, %s136
    %s151 = sphi 0, %s137
    %s155 = sphi 0, %s155
    %s157 = sphi 0, %s155
    %s158 = sphi 0, %s157
    %s172 = sphi 0, %s158
    %s176 = sphi 0, %s176
    %s178 = sphi 0, %s176
    %s179 = sphi 0, %s178
    %s193 = sphi 0, %s179
    %s197 = sphi 0, %s197
    %s199 = sphi 0, %s197
    %s200 = sphi 0, %s199
    %s214 = sphi 0, %s200
    %s218 = sphi 0, %s218
    %s220 = sphi 0, %s218
    %s221 = sphi 0, %s220
    %s235 = sphi 0, %s221
    %s239 = sphi 0, %s239
    %s241 = sphi 0, %s239
    %s242 = sphi 0, %s241
    %s256 = sphi 0, %s242
    %s264 = sphi 0, %s266
    %s267 = sphi 0, %s264
    %s268 = sphi 0, %s267
    %s284 = sphi 0, %s268
  $region4: #{dasi_forward.1} parent=0 // loop_header_branch
    %19 = sbr.rel (%p17) target = $region8
  $region5: #{dasi_forward.1} parent=0 // loop_body
    %s21 = ssub.s32 %s16, 1
    %s22 = ssub.s32 %s16, 2
    %s29 = sadd.s32 1, %s24
    %p30 = scmp.ge.s32.totalorder %s29, 2
    %s31 = scalar_select %p30, 0, %s29
    %s32 = sadd.s32 1, %s23
    %s33 = scalar_select %p30, %s32, %s23
    %p34 = scmp.ge.s32.totalorder %s33, 1
    %s35 = scalar_select %p34, 0, %s33
    %s36 = ssub.s32 %s24, %s31
    %s37 = ssub.s32 %s23, %s35
    %s38 = sor.u32 %s36, %s37
    %p39 = scmp.eq.s32.totalorder %s38, 0
    %s41 = sadd.s32 %s40, 1
    %s42 = scalar_select %p39, %s40, %s41
    %p45 = pneg %p39
    %p46 = scmp.eq.s32.totalorder %s16, 1
    %p47 = por %p45, %p46
    %p48 = scmp.ne.s32.totalorder %s40, %s43
    %p49 = scmp.eq.s32.totalorder %s16, 0
    %p50 = por %p48, %p49
    %p51 = scmp.ne.s32.totalorder %s40, %s43
    %p52 = scmp.eq.s32.totalorder %s21, 1
    %p53 = por %p51, %p52
    %p54 = scmp.ne.s32.totalorder %s43, %s44
    %p55 = scmp.eq.s32.totalorder %s21, 0
    %p56 = por %p54, %p55
    %p57 = scmp.ne.s32.totalorder %s43, %s44
    %p58 = scmp.eq.s32.totalorder %s22, 1
    %p59 = por %p57, %p58
    %p61 = scmp.ne.s32.totalorder %s44, %s60
    %p62 = scmp.eq.s32.totalorder %s22, 0
    %p63 = por %p61, %p62
    %s64 = ssub.s32 %s24, %s31
    %s65 = ssub.s32 %s23, %s35
    %s66 = sor.u32 %s64, %s65
    %p67 = scmp.eq.s32.totalorder %s66, 0
    %s69 = sadd.s32 %s68, 1
    %s70 = scalar_select %p67, %s68, %s69
    %p73 = pneg %p67
    %p74 = scmp.eq.s32.totalorder %s16, 1
    %p75 = por %p73, %p74
    %p76 = scmp.ne.s32.totalorder %s68, %s71
    %p77 = scmp.eq.s32.totalorder %s16, 0
    %p78 = por %p76, %p77
    %p79 = scmp.ne.s32.totalorder %s68, %s71
    %p80 = scmp.eq.s32.totalorder %s21, 1
    %p81 = por %p79, %p80
    %p82 = scmp.ne.s32.totalorder %s71, %s72
    %p83 = scmp.eq.s32.totalorder %s21, 0
    %p84 = por %p82, %p83
    %p85 = scmp.ne.s32.totalorder %s71, %s72
    %p86 = scmp.eq.s32.totalorder %s22, 1
    %p87 = por %p85, %p86
    %p89 = scmp.ne.s32.totalorder %s72, %s88
    %p90 = scmp.eq.s32.totalorder %s22, 0
    %p91 = por %p89, %p90
    %s93 = sadd.s32 %s92, 1
    %p96 = scmp.eq.s32.totalorder %s16, 1
    %p97 = scmp.ne.s32.totalorder %s92, %s94
    %p98 = scmp.eq.s32.totalorder %s16, 0
    %p99 = por %p97, %p98
    %p100 = scmp.ne.s32.totalorder %s92, %s94
    %p101 = scmp.eq.s32.totalorder %s21, 1
    %p102 = por %p100, %p101
    %p103 = scmp.ne.s32.totalorder %s94, %s95
    %p104 = scmp.eq.s32.totalorder %s21, 0
    %p105 = por %p103, %p104
    %p106 = scmp.ne.s32.totalorder %s94, %s95
    %p107 = scmp.eq.s32.totalorder %s22, 1
    %p108 = por %p106, %p107
    %p110 = scmp.ne.s32.totalorder %s95, %s109
    %p111 = scmp.eq.s32.totalorder %s22, 0
    %p112 = por %p110, %p111
    %s114 = sadd.s32 %s113, 1
    %p117 = scmp.eq.s32.totalorder %s16, 1
    %p118 = scmp.ne.s32.totalorder %s113, %s115
    %p119 = scmp.eq.s32.totalorder %s16, 0
    %p120 = por %p118, %p119
    %p121 = scmp.ne.s32.totalorder %s113, %s115
    %p122 = scmp.eq.s32.totalorder %s21, 1
    %p123 = por %p121, %p122
    %p124 = scmp.ne.s32.totalorder %s115, %s116
    %p125 = scmp.eq.s32.totalorder %s21, 0
    %p126 = por %p124, %p125
    %p127 = scmp.ne.s32.totalorder %s115, %s116
    %p128 = scmp.eq.s32.totalorder %s22, 1
    %p129 = por %p127, %p128
    %p131 = scmp.ne.s32.totalorder %s116, %s130
    %p132 = scmp.eq.s32.totalorder %s22, 0
    %p133 = por %p131, %p132
    %s135 = sadd.s32 %s134, 1
    %p138 = scmp.eq.s32.totalorder %s16, 1
    %p139 = scmp.ne.s32.totalorder %s134, %s136
    %p140 = scmp.eq.s32.totalorder %s16, 0
    %p141 = por %p139, %p140
    %p142 = scmp.ne.s32.totalorder %s134, %s136
    %p143 = scmp.eq.s32.totalorder %s21, 1
    %p144 = por %p142, %p143
    %p145 = scmp.ne.s32.totalorder %s136, %s137
    %p146 = scmp.eq.s32.totalorder %s21, 0
    %p147 = por %p145, %p146
    %p148 = scmp.ne.s32.totalorder %s136, %s137
    %p149 = scmp.eq.s32.totalorder %s22, 1
    %p150 = por %p148, %p149
    %p152 = scmp.ne.s32.totalorder %s137, %s151
    %p153 = scmp.eq.s32.totalorder %s22, 0
    %p154 = por %p152, %p153
    %s156 = sadd.s32 %s155, 1
    %p159 = scmp.eq.s32.totalorder %s16, 1
    %p160 = scmp.ne.s32.totalorder %s155, %s157
    %p161 = scmp.eq.s32.totalorder %s16, 0
    %p162 = por %p160, %p161
    %p163 = scmp.ne.s32.totalorder %s155, %s157
    %p164 = scmp.eq.s32.totalorder %s21, 1
    %p165 = por %p163, %p164
    %p166 = scmp.ne.s32.totalorder %s157, %s158
    %p167 = scmp.eq.s32.totalorder %s21, 0
    %p168 = por %p166, %p167
    %p169 = scmp.ne.s32.totalorder %s157, %s158
    %p170 = scmp.eq.s32.totalorder %s22, 1
    %p171 = por %p169, %p170
    %p173 = scmp.ne.s32.totalorder %s158, %s172
    %p174 = scmp.eq.s32.totalorder %s22, 0
    %p175 = por %p173, %p174
    %s177 = sadd.s32 %s176, 1
    %p180 = scmp.eq.s32.totalorder %s16, 1
    %p181 = scmp.ne.s32.totalorder %s176, %s178
    %p182 = scmp.eq.s32.totalorder %s16, 0
    %p183 = por %p181, %p182
    %p184 = scmp.ne.s32.totalorder %s176, %s178
    %p185 = scmp.eq.s32.totalorder %s21, 1
    %p186 = por %p184, %p185
    %p187 = scmp.ne.s32.totalorder %s178, %s179
    %p188 = scmp.eq.s32.totalorder %s21, 0
    %p189 = por %p187, %p188
    %p190 = scmp.ne.s32.totalorder %s178, %s179
    %p191 = scmp.eq.s32.totalorder %s22, 1
    %p192 = por %p190, %p191
    %p194 = scmp.ne.s32.totalorder %s179, %s193
    %p195 = scmp.eq.s32.totalorder %s22, 0
    %p196 = por %p194, %p195
    %s198 = sadd.s32 %s197, 1
    %p201 = scmp.eq.s32.totalorder %s16, 1
    %p202 = scmp.ne.s32.totalorder %s197, %s199
    %p203 = scmp.eq.s32.totalorder %s16, 0
    %p204 = por %p202, %p203
    %p205 = scmp.ne.s32.totalorder %s197, %s199
    %p206 = scmp.eq.s32.totalorder %s21, 1
    %p207 = por %p205, %p206
    %p208 = scmp.ne.s32.totalorder %s199, %s200
    %p209 = scmp.eq.s32.totalorder %s21, 0
    %p210 = por %p208, %p209
    %p211 = scmp.ne.s32.totalorder %s199, %s200
    %p212 = scmp.eq.s32.totalorder %s22, 1
    %p213 = por %p211, %p212
    %p215 = scmp.ne.s32.totalorder %s200, %s214
    %p216 = scmp.eq.s32.totalorder %s22, 0
    %p217 = por %p215, %p216
    %s219 = sadd.s32 %s218, 1
    %p222 = scmp.eq.s32.totalorder %s16, 1
    %p223 = scmp.ne.s32.totalorder %s218, %s220
    %p224 = scmp.eq.s32.totalorder %s16, 0
    %p225 = por %p223, %p224
    %p226 = scmp.ne.s32.totalorder %s218, %s220
    %p227 = scmp.eq.s32.totalorder %s21, 1
    %p228 = por %p226, %p227
    %p229 = scmp.ne.s32.totalorder %s220, %s221
    %p230 = scmp.eq.s32.totalorder %s21, 0
    %p231 = por %p229, %p230
    %p232 = scmp.ne.s32.totalorder %s220, %s221
    %p233 = scmp.eq.s32.totalorder %s22, 1
    %p234 = por %p232, %p233
    %p236 = scmp.ne.s32.totalorder %s221, %s235
    %p237 = scmp.eq.s32.totalorder %s22, 0
    %p238 = por %p236, %p237
    %s240 = sadd.s32 %s239, 1
    %p243 = scmp.eq.s32.totalorder %s16, 1
    %p244 = scmp.ne.s32.totalorder %s239, %s241
    %p245 = scmp.eq.s32.totalorder %s16, 0
    %p246 = por %p244, %p245
    %p247 = scmp.ne.s32.totalorder %s239, %s241
    %p248 = scmp.eq.s32.totalorder %s21, 1
    %p249 = por %p247, %p248
    %p250 = scmp.ne.s32.totalorder %s241, %s242
    %p251 = scmp.eq.s32.totalorder %s21, 0
    %p252 = por %p250, %p251
    %p253 = scmp.ne.s32.totalorder %s241, %s242
    %p254 = scmp.eq.s32.totalorder %s22, 1
    %p255 = por %p253, %p254
    %p257 = scmp.ne.s32.totalorder %s242, %s256
    %p258 = scmp.eq.s32.totalorder %s22, 0
    %p259 = por %p257, %p258
    %s260 = ssub.s32 %s24, %s31
    %s261 = ssub.s32 %s23, %s35
    %s262 = sor.u32 %s260, %s261
    %p263 = scmp.eq.s32.totalorder %s262, 0
    %s265 = sadd.s32 %s264, 1
    %s266 = scalar_select %p263, %s264, %s265
    %p269 = pneg %p263
    %p270 = scmp.eq.s32.totalorder %s16, 1
    %p271 = por %p269, %p270
    %p272 = scmp.ne.s32.totalorder %s264, %s267
    %p273 = scmp.eq.s32.totalorder %s16, 0
    %p274 = por %p272, %p273
    %p275 = scmp.ne.s32.totalorder %s264, %s267
    %p276 = scmp.eq.s32.totalorder %s21, 1
    %p277 = por %p275, %p276
    %p278 = scmp.ne.s32.totalorder %s267, %s268
    %p279 = scmp.eq.s32.totalorder %s21, 0
    %p280 = por %p278, %p279
    %p281 = scmp.ne.s32.totalorder %s267, %s268
    %p282 = scmp.eq.s32.totalorder %s22, 1
    %p283 = por %p281, %p282
    %p285 = scmp.ne.s32.totalorder %s268, %s284
    %p286 = scmp.eq.s32.totalorder %s22, 0
    %p287 = por %p285, %p286
    %p288 = scmp.le.s32.totalorder 1, %s16
    %p289 = scmp.lt.s32.totalorder %s16, 3
    %p290 = pnand %p288, %p289
    %p291 = pneg %p290
    // Predicated region
    $region9: #{dasi_forward.1} parent=5 // pred_check
      _
    $region10: #{dasi_forward.1} parent=5 // pred_check_branch
      %293 = sbr.rel (%p290) target = $region12
    $region11: #{dasi_forward.1} parent=5 // pred_region
      %s294 = ssub.s32 %s16, 1
      // Predicated region
      $region13: #{dasi_forward.1} parent=11 // pred_check
        %p295 = pneg %p105
      $region14: #{dasi_forward.1} parent=11 // pred_check_branch
        %297 = sbr.rel (%p295) target = $region16
      $region15: #{dasi_forward.1} parent=11 // pred_region
        _
      $region16: #{dasi_forward.1} parent=11 // pred_fallthru
        _
      // Predicated region
      $region17: #{dasi_forward.1} parent=11 // pred_check
        %p298 = pneg %p126
      $region18: #{dasi_forward.1} parent=11 // pred_check_branch
        %300 = sbr.rel (%p298) target = $region20
      $region19: #{dasi_forward.1} parent=11 // pred_region
        _
      $region20: #{dasi_forward.1} parent=11 // pred_fallthru
        _
      // Predicated region
      $region21: #{dasi_forward.1} parent=11 // pred_check
        %p301 = pneg %p147
      $region22: #{dasi_forward.1} parent=11 // pred_check_branch
        %303 = sbr.rel (%p301) target = $region24
      $region23: #{dasi_forward.1} parent=11 // pred_region
        _
      $region24: #{dasi_forward.1} parent=11 // pred_fallthru
        _
      // Predicated region
      $region25: #{dasi_forward.1} parent=11 // pred_check
        %p304 = pneg %p168
      $region26: #{dasi_forward.1} parent=11 // pred_check_branch
        %306 = sbr.rel (%p304) target = $region28
      $region27: #{dasi_forward.1} parent=11 // pred_region
        _
      $region28: #{dasi_forward.1} parent=11 // pred_fallthru
        _
      // Predicated region
      $region29: #{dasi_forward.1} parent=11 // pred_check
        %p307 = pneg %p189
      $region30: #{dasi_forward.1} parent=11 // pred_check_branch
        %309 = sbr.rel (%p307) target = $region32
      $region31: #{dasi_forward.1} parent=11 // pred_region
        _
      $region32: #{dasi_forward.1} parent=11 // pred_fallthru
        _
      // Predicated region
      $region33: #{dasi_forward.1} parent=11 // pred_check
        %p310 = pneg %p210
      $region34: #{dasi_forward.1} parent=11 // pred_check_branch
        %312 = sbr.rel (%p310) target = $region36
      $region35: #{dasi_forward.1} parent=11 // pred_region
        _
      $region36: #{dasi_forward.1} parent=11 // pred_fallthru
        _
      // Predicated region
      $region37: #{dasi_forward.1} parent=11 // pred_check
        %p313 = pneg %p231
      $region38: #{dasi_forward.1} parent=11 // pred_check_branch
        %315 = sbr.rel (%p313) target = $region40
      $region39: #{dasi_forward.1} parent=11 // pred_region
        _
      $region40: #{dasi_forward.1} parent=11 // pred_fallthru
        _
      // Predicated region
      $region41: #{dasi_forward.1} parent=11 // pred_check
        %p316 = pneg %p252
      $region42: #{dasi_forward.1} parent=11 // pred_check_branch
        %318 = sbr.rel (%p316) target = $region44
      $region43: #{dasi_forward.1} parent=11 // pred_region
        _
      $region44: #{dasi_forward.1} parent=11 // pred_fallthru
        _
    $region12: #{dasi_forward.1} parent=5 // pred_fallthru
      _
    %p319 = scmp.lt.s32.totalorder %s16, 2
    // Predicated region
    $region45: #{dasi_forward.1} parent=5 // pred_check
      %p320 = pneg %p319
    $region46: #{dasi_forward.1} parent=5 // pred_check_branch
      %322 = sbr.rel (%p320) target = $region48
    $region47: #{dasi_forward.1} parent=5 // pred_region
      // Predicated region
      $region49: #{dasi_forward.1} parent=47 // pred_check
        %p323 = pneg %p50
      $region50: #{dasi_forward.1} parent=47 // pred_check_branch
        %325 = sbr.rel (%p323) target = $region52
      $region51: #{dasi_forward.1} parent=47 // pred_region
        %s326 = smul.u32 2, %s23
        %p327 = scmp.lt.s32.totalorder %s24, 1
        %s328 = scalar_select %p327, %s24, 1
        %p329 = scmp.lt.s32.totalorder %s326, 1
        %s330 = scalar_select %p329, %s326, 1
        %s331 = smul.addr %s328, 12
        %s332 = sadd.s32 %s330, %s331
        %s333 = smul.addr %s332, 4
        %s334 = scalar_lea.vmem %s0, %s333
        %s335 = smul.u32 2, %s23
      $region52: #{dasi_forward.1} parent=47 // pred_fallthru
        _
      // Predicated region
      $region53: #{dasi_forward.1} parent=47 // pred_check
        %p336 = pneg %p78
      $region54: #{dasi_forward.1} parent=47 // pred_check_branch
        %338 = sbr.rel (%p336) target = $region56
      $region55: #{dasi_forward.1} parent=47 // pred_region
        %p339 = scmp.lt.s32.totalorder %s24, 1
        %s340 = scalar_select %p339, %s24, 1
        %p341 = scmp.lt.s32.totalorder %s23, 0
        %s342 = scalar_select %p341, %s23, 0
        %s343 = smul.addr %s340, 2
        %s344 = sadd.s32 %s342, %s343
        %s345 = smul.addr %s344, 4
        %s346 = scalar_lea.vmem %s1, %s345
      $region56: #{dasi_forward.1} parent=47 // pred_fallthru
        _
    $region48: #{dasi_forward.1} parent=5 // pred_fallthru
      _
    %p347 = scmp.le.s32.totalorder 1, %s16
    %p348 = scmp.lt.s32.totalorder %s16, 3
    %p349 = pnand %p347, %p348
    %p350 = pneg %p349
    // Predicated region
    $region57: #{dasi_forward.1} parent=5 // pred_check
      _
    $region58: #{dasi_forward.1} parent=5 // pred_check_branch
      %352 = sbr.rel (%p349) target = $region60
    $region59: #{dasi_forward.1} parent=5 // pred_region
      %s353 = ssub.s32 %s16, 1
      %s354 = smul.u32 2, %s25
      %p355 = scmp.lt.s32.totalorder %s26, 1
      %s356 = scalar_select %p355, %s26, 1
      %p357 = scmp.lt.s32.totalorder %s354, 1
      %s358 = scalar_select %p357, %s354, 1
      %s359 = smul.addr %s356, 12
      %s360 = sadd.s32 %s358, %s359
      %s361 = smul.addr %s360, 4
      %s362 = scalar_lea.vmem %s0, %s361
      %p363 = pneg %p56
      %p364 = pneg %p53
      %p365 = scmp.lt.s32.totalorder %s26, 1
      %s366 = scalar_select %p365, %s26, 1
      %p367 = scmp.lt.s32.totalorder %s25, 0
      %s368 = scalar_select %p367, %s25, 0
      %s369 = smul.addr %s366, 2
      %s370 = sadd.s32 %s368, %s369
      %s371 = smul.addr %s370, 4
      %s372 = scalar_lea.vmem %s1, %s371
      %p373 = pneg %p84
      %p374 = pneg %p81
      %p375 = pneg %p105
      %p376 = pneg %p102
      %p377 = pneg %p126
      %p378 = pneg %p123
      %p379 = pneg %p147
      %p380 = pneg %p144
      %p381 = pneg %p168
      %p382 = pneg %p165
      %p383 = pneg %p189
      %p384 = pneg %p186
      %p385 = pneg %p210
      %p386 = pneg %p207
      %p387 = pneg %p231
      %p388 = pneg %p228
      %p389 = pneg %p252
      %p390 = pneg %p249
      %p391 = pneg %p280
      %p392 = pneg %p277
      %s393 = smul.u32 2, %s25
      %p394 = scmp.lt.s32.totalorder %s26, 1
      %s395 = scalar_select %p394, %s26, 1
      %p396 = scmp.lt.s32.totalorder %s393, 1
      %s397 = scalar_select %p396, %s393, 1
      %s398 = smul.addr %s395, 2
      %s399 = sadd.s32 %s397, %s398
      %s400 = smul.addr %s399, 8
      %s401 = scalar_lea.vmem %s10, %s400
      %s402 = smul.u32 2, %s25
      %p403 = scmp.lt.s32.totalorder %s26, 1
      %s404 = scalar_select %p403, %s26, 1
      %p405 = scmp.lt.s32.totalorder %s402, 1
      %s406 = scalar_select %p405, %s402, 1
      %s407 = smul.addr %s404, 12
      %s408 = sadd.s32 %s406, %s407
      %s409 = smul.addr %s408, 4
      %s410 = scalar_lea.vmem %s0, %s409
      %s411 = smul.u32 2, %s25
      %p412 = scmp.lt.s32.totalorder %s26, 1
      %s413 = scalar_select %p412, %s26, 1
      %p414 = scmp.lt.s32.totalorder %s25, 0
      %s415 = scalar_select %p414, %s25, 0
      %s416 = smul.addr %s413, 2
      %s417 = sadd.s32 %s415, %s416
      %s418 = smul.addr %s417, 4
      %s419 = scalar_lea.vmem %s1, %s418
      %s420 = smul.u32 2, %s25
      %p421 = scmp.lt.s32.totalorder %s26, 1
      %s422 = scalar_select %p421, %s26, 1
      %p423 = scmp.lt.s32.totalorder %s420, 1
      %s424 = scalar_select %p423, %s420, 1
      %s425 = smul.addr %s422, 2
      %s426 = sadd.s32 %s424, %s425
      %s427 = smul.addr %s426, 8
      %s428 = scalar_lea.vmem %s10, %s427
      %s429 = smul.u32 2, %s25
      %v431 = vld [vmem:[%s3] sm:$0xf]
      %v432 = vld [vmem:[%s3 + $0x4] sm:$0xf]
      %v433 = vld [vmem:[%s410] sm:$0xff]
      %v434 = vld [vmem:[%s410 + $0x8] sm:$0xff]
      %v435 = vld [vmem:[%s410 + $0x10] sm:$0xff]
      %v436 = vld [vmem:[%s410 + $0x18] sm:$0xff]
      %v437 = vld [vmem:[%s410 + $0x20] sm:$0xff]
      %v438 = vld [vmem:[%s410 + $0x28] sm:$0x33]
      %v439 = vld [vmem:[%s4] sm:$0xff]
      %v440 = vld [vmem:[%s4 + $0x8] sm:$0xff]
      %442 = vset.pattern.permute.xlu0 0
      %443 = vperm.xlu0 %442, %v439
      %v444 = vpop.permute.xlu0 %443
      %447 = vset.pattern.permute.xlu0 0
      %448 = vperm.xlu0 %447, %v440
      %v449 = vpop.permute.xlu0 %448
      %v453 = vunpack.c.l.b16 %v431
      %v454 = vunpack.c.l.b16 %v432
      %v455 = vpack.c.b16 %v454, %v453
      %v462 = vunpack.c.l.b16 %v433
      %v463 = vunpack.c.h.b16 %v433
      %v464 = vunpack.c.l.b16 %v434
      %v465 = vunpack.c.h.b16 %v434
      %v466 = vunpack.c.l.b16 %v435
      %v467 = vunpack.c.h.b16 %v435
      %v468 = vunpack.c.l.b16 %v436
      %v469 = vunpack.c.h.b16 %v436
      %v470 = vunpack.c.l.b16 %v437
      %v471 = vunpack.c.h.b16 %v437
      %v472 = vunpack.c.l.b16 %v438
      %v473 = vunpack.c.h.b16 %v438
      %v474 = vpack.c.b16 %v464, %v462
      %v475 = vpack.c.b16 %v465, %v463
      %v476 = vpack.c.b16 %v468, %v466
      %v477 = vpack.c.b16 %v469, %v467
      %v478 = vpack.c.b16 %v472, %v470
      %v479 = vpack.c.b16 %v473, %v471
      %vm484 = vcmask 359424
      %v486 = vsel %vm484, %v455, 0
      %vm488 = vcmask 1045504
      %v490 = vsel %vm488, %v478, 0
      %v493 = vsel %vm488, %v479, 0
      %495 = vmatprep.subr.bf16.mxu0 %v475
      %496 = vmatpush1.bf16.msra.mxu0 %v474
      %497 = vmatprep.subr.bf16.mxu0 %v477
      %498 = vmatpush1.bf16.msra.mxu0 %v476
      %499 = vmatprep.subr.bf16.mxu0 %v493
      %500 = vmatpush1.bf16.msra.mxu0 %v490
      %501 = vmatprep.subr.bf16.mxu0 0
      %502 = vmatpush1.bf16.msra.mxu0 0
      %503 = vmatprep.subr.bf16.mxu0 0
      %504 = vmatpush1.bf16.msra.mxu0 0
      %505 = vmatprep.subr.bf16.mxu0 0
      %506 = vmatpush1.bf16.msra.mxu0 0
      %507 = vmatprep.subr.bf16.mxu0 0
      %508 = vmatpush1.bf16.msra.mxu0 0
      %509 = vmatprep.subr.bf16.mxu0 0
      %510 = vmatpush1.bf16.msra.mxu0 0
      %511 = vmatprep.subr.bf16.mxu0 0
      %512 = vmatpush1.bf16.msra.mxu0 0
      %513 = vmatprep.subr.bf16.mxu0 0
      %514 = vmatpush1.bf16.msra.mxu0 0
      %515 = vmatprep.subr.bf16.mxu0 0
      %516 = vmatpush1.bf16.msra.mxu0 0
      %517 = vmatprep.subr.bf16.mxu0 0
      %518 = vmatpush1.bf16.msra.mxu0 0
      %519 = vmatprep.subr.bf16.mxu0 0
      %520 = vmatpush1.bf16.msra.mxu0 0
      %521 = vmatprep.subr.bf16.mxu0 0
      %522 = vmatpush1.bf16.msra.mxu0 0
      %523 = vmatprep.subr.bf16.mxu0 0
      %524 = vmatpush1.bf16.msra.mxu0 0
      %525 = vmatprep.subr.bf16.mxu0 0
      %526 = vmatpush1.bf16.msra.mxu0 0
      %527 = vmatprep.mubr.bf16.mxu0 0
      %528 = vmatmul.mubr.bf16.gmra.mrb[0].mxu0 %v486
      %v529 = vpop.f32.mrb[0].mxu0
      %v530 = vadd.f32 %v444, %v529
      %v531 = vpop.f32.mrb[0].mxu0
      %v532 = vadd.f32 %v444, %v531
      %v533 = vpop.f32.mrb[0].mxu0
      %v534 = vadd.f32 %v449, %v533
      %v535 = vpop.f32.mrb[0].mxu0
      %v536 = vadd.f32 %v449, %v535
      %537 = vdwg.mxu0
      %v538 = vld [vmem:[%s5] sm:$0xf]
      %v539 = vld [vmem:[%s419] sm:$0xf]
      %v540 = vld [vmem:[%s419 + $0x4] sm:$0xf]
      %v543 = vunpack.c.l.b16 %v539
      %v544 = vunpack.c.l.b16 %v540
      %v545 = vpack.c.b16 %v544, %v543
      %vm547 = vcmask 130048
      %v549 = vsel %vm547, %v538, 0
      %551 = vmatprep.subr.bf16.mxu0 0
      %552 = vmatpush1.bf16.msra.mxu0 %v545
      %553 = vmatprep.subr.bf16.mxu0 0
      %554 = vmatpush1.bf16.msra.mxu0 0
      %555 = vmatprep.subr.bf16.mxu0 0
      %556 = vmatpush1.bf16.msra.mxu0 0
      %557 = vmatprep.subr.bf16.mxu0 0
      %558 = vmatpush1.bf16.msra.mxu0 0
      %559 = vmatprep.subr.bf16.mxu0 0
      %560 = vmatpush1.bf16.msra.mxu0 0
      %561 = vmatprep.subr.bf16.mxu0 0
      %562 = vmatpush1.bf16.msra.mxu0 0
      %563 = vmatprep.subr.bf16.mxu0 0
      %564 = vmatpush1.bf16.msra.mxu0 0
      %565 = vmatprep.subr.bf16.mxu0 0
      %566 = vmatpush1.bf16.msra.mxu0 0
      %567 = vmatprep.subr.bf16.mxu0 0
      %568 = vmatpush1.bf16.msra.mxu0 0
      %569 = vmatprep.subr.bf16.mxu0 0
      %570 = vmatpush1.bf16.msra.mxu0 0
      %571 = vmatprep.subr.bf16.mxu0 0
      %572 = vmatpush1.bf16.msra.mxu0 0
      %573 = vmatprep.subr.bf16.mxu0 0
      %574 = vmatpush1.bf16.msra.mxu0 0
      %575 = vmatprep.subr.bf16.mxu0 0
      %576 = vmatpush1.bf16.msra.mxu0 0
      %577 = vmatprep.subr.bf16.mxu0 0
      %578 = vmatpush1.bf16.msra.mxu0 0
      %579 = vmatprep.subr.bf16.mxu0 0
      %580 = vmatpush1.bf16.msra.mxu0 0
      %581 = vmatprep.subr.bf16.mxu0 0
      %582 = vmatpush1.bf16.msra.mxu0 0
      %583 = vmatprep.mubr.bf16.mxu0 0
      %584 = vmatmul.mubr.bf16.gmra.mrb[0].mxu0 %v549
      %v585 = vpop.f32.mrb[0].mxu0
      %v586 = vadd.f32 0.0, %v585
      %v587 = vpop.f32.mrb[0].mxu0
      %v588 = vpop.f32.mrb[0].mxu0
      %v589 = vpop.f32.mrb[0].mxu0
      %590 = vdwg.mxu0
      %v591 = vpack.c.bf16 %v586, %v586
      %v592 = vld [vmem:[%s2] sm:$0xff]
      %v593 = vld [vmem:[%s2 + $0x8] sm:$0xff]
      %v594 = vld [vmem:[%s2 + $0x10] sm:$0xff]
      %v595 = vld [vmem:[%s2 + $0x18] sm:$0xff]
      %v596 = vld [vmem:[%s2 + $0x20] sm:$0xff]
      %v597 = vld [vmem:[%s2 + $0x28] sm:$0xff]
      %v598 = vld [vmem:[%s2 + $0x30] sm:$0xff]
      %v599 = vld [vmem:[%s2 + $0x38] sm:$0xff]
      %v600 = vld [vmem:[%s2 + $0x40] sm:$0xff]
      %v601 = vld [vmem:[%s2 + $0x48] sm:$0xff]
      %v602 = vld [vmem:[%s2 + $0x50] sm:$0xff]
      %v603 = vld [vmem:[%s2 + $0x58] sm:$0xff]
      %v604 = vld [vmem:[%s2 + $0x60] sm:$0xff]
      %v605 = vld [vmem:[%s2 + $0x68] sm:$0xff]
      %v606 = vld [vmem:[%s2 + $0x70] sm:$0xff]
      %v607 = vld [vmem:[%s2 + $0x78] sm:$0xff]
      %v608 = vld [vmem:[%s6] sm:$0xff]
      %610 = vset.pattern.permute.xlu0 0
      %611 = vperm.xlu0 %610, %v608
      %v612 = vpop.permute.xlu0 %611
      %v630 = vunpack.c.l.b16 %v592
      %v631 = vunpack.c.h.b16 %v592
      %v632 = vunpack.c.l.b16 %v593
      %v633 = vunpack.c.h.b16 %v593
      %v634 = vunpack.c.l.b16 %v594
      %v635 = vunpack.c.h.b16 %v594
      %v636 = vunpack.c.l.b16 %v595
      %v637 = vunpack.c.h.b16 %v595
      %v638 = vunpack.c.l.b16 %v596
      %v639 = vunpack.c.h.b16 %v596
      %v640 = vunpack.c.l.b16 %v597
      %v641 = vunpack.c.h.b16 %v597
      %v642 = vunpack.c.l.b16 %v598
      %v643 = vunpack.c.h.b16 %v598
      %v644 = vunpack.c.l.b16 %v599
      %v645 = vunpack.c.h.b16 %v599
      %v646 = vunpack.c.l.b16 %v600
      %v647 = vunpack.c.h.b16 %v600
      %v648 = vunpack.c.l.b16 %v601
      %v649 = vunpack.c.h.b16 %v601
      %v650 = vunpack.c.l.b16 %v602
      %v651 = vunpack.c.h.b16 %v602
      %v652 = vunpack.c.l.b16 %v603
      %v653 = vunpack.c.h.b16 %v603
      %v654 = vunpack.c.l.b16 %v604
      %v655 = vunpack.c.h.b16 %v604
      %v656 = vunpack.c.l.b16 %v605
      %v657 = vunpack.c.h.b16 %v605
      %v658 = vunpack.c.l.b16 %v606
      %v659 = vunpack.c.h.b16 %v606
      %v660 = vunpack.c.l.b16 %v607
      %v661 = vunpack.c.h.b16 %v607
      %v662 = vpack.c.b16 %v632, %v630
      %v663 = vpack.c.b16 %v633, %v631
      %v664 = vpack.c.b16 %v636, %v634
      %v665 = vpack.c.b16 %v637, %v635
      %v666 = vpack.c.b16 %v640, %v638
      %v667 = vpack.c.b16 %v641, %v639
      %v668 = vpack.c.b16 %v644, %v642
      %v669 = vpack.c.b16 %v645, %v643
      %v670 = vpack.c.b16 %v648, %v646
      %v671 = vpack.c.b16 %v649, %v647
      %v672 = vpack.c.b16 %v652, %v650
      %v673 = vpack.c.b16 %v653, %v651
      %v674 = vpack.c.b16 %v656, %v654
      %v675 = vpack.c.b16 %v657, %v655
      %v676 = vpack.c.b16 %v660, %v658
      %v677 = vpack.c.b16 %v661, %v659
      %694 = vmatprep.subr.bf16.mxu0 %v663
      %695 = vmatpush1.bf16.msra.mxu0 %v662
      %696 = vmatprep.subr.bf16.mxu0 %v665
      %697 = vmatpush1.bf16.msra.mxu0 %v664
      %698 = vmatprep.subr.bf16.mxu0 %v667
      %699 = vmatpush1.bf16.msra.mxu0 %v666
      %700 = vmatprep.subr.bf16.mxu0 %v669
      %701 = vmatpush1.bf16.msra.mxu0 %v668
      %702 = vmatprep.subr.bf16.mxu0 %v671
      %703 = vmatpush1.bf16.msra.mxu0 %v670
      %704 = vmatprep.subr.bf16.mxu0 %v673
      %705 = vmatpush1.bf16.msra.mxu0 %v672
      %706 = vmatprep.subr.bf16.mxu0 %v675
      %707 = vmatpush1.bf16.msra.mxu0 %v674
      %708 = vmatprep.subr.bf16.mxu0 %v677
      %709 = vmatpush1.bf16.msra.mxu0 %v676
      %710 = vmatprep.subr.bf16.mxu0 0
      %711 = vmatpush1.bf16.msra.mxu0 0
      %712 = vmatprep.subr.bf16.mxu0 0
      %713 = vmatpush1.bf16.msra.mxu0 0
      %714 = vmatprep.subr.bf16.mxu0 0
      %715 = vmatpush1.bf16.msra.mxu0 0
      %716 = vmatprep.subr.bf16.mxu0 0
      %717 = vmatpush1.bf16.msra.mxu0 0
      %718 = vmatprep.subr.bf16.mxu0 0
      %719 = vmatpush1.bf16.msra.mxu0 0
      %720 = vmatprep.subr.bf16.mxu0 0
      %721 = vmatpush1.bf16.msra.mxu0 0
      %722 = vmatprep.subr.bf16.mxu0 0
      %723 = vmatpush1.bf16.msra.mxu0 0
      %724 = vmatprep.subr.bf16.mxu0 0
      %725 = vmatpush1.bf16.msra.mxu0 0
      %726 = vmatprep.mubr.bf16.mxu0 0
      %727 = vmatmul.mubr.bf16.gmra.mrb[0].mxu0 %v591
      %v728 = vpop.f32.mrb[0].mxu0
      %v729 = vadd.f32 %v612, %v728
      %v730 = vpop.f32.mrb[0].mxu0
      %v731 = vadd.f32 %v612, %v730
      %v732 = vpop.f32.mrb[0].mxu0
      %v733 = vpop.f32.mrb[0].mxu0
      %734 = vdwg.mxu0
      %v735 = vxor.u32 %v530, 2147483648
      %v736 = vxor.u32 %v532, 2147483648
      %v737 = vmul.f32 %v735, 1.442695
      %v738 = vpow.pop %v737
      %v739 = vmul.f32 %v736, 1.442695
      %v740 = vpow.pop %v739
      %v741 = vadd.f32 %v738, 1.0
      %v742 = vadd.f32 %v740, 1.0
      %v743 = vrcp.pop %v741
      %v744 = vmul.f32 1.0, %v743
      %v745 = vrcp.pop %v742
      %v746 = vmul.f32 1.0, %v745
      %v747 = vmul.f32 %v744, %v729
      %v748 = vmul.f32 %v746, %v731
      %v749 = vsub.f32 1.0, %v744
      %v750 = vsub.f32 1.0, %v746
      %v751 = vmul.f32 %v749, %v534
      %v752 = vmul.f32 %v750, %v536
      %v753 = vadd.f32 %v747, %v751
      %v754 = vadd.f32 %v748, %v752
      %v755 = vld [vmem:[%s7] sm:$0xf]
      %v756 = vpack.c.bf16 %v753, %v753
      %v757 = vpack.c.bf16 %v754, %v754
      %v758 = vld [vmem:[%s8] sm:$0xff]
      %760 = vset.pattern.permute.xlu0 0
      %761 = vperm.xlu0 %760, %v758
      %v762 = vpop.permute.xlu0 %761
      %vm764 = vcmask 64512
      %v766 = vsel %vm764, %v755, 0
      %vm768 = vcmask 1043456
      %v770 = vsel %vm768, %v756, 0
      %v773 = vsel %vm768, %v757, 0
      %775 = vmatprep.subr.bf16.mxu0 %v773
      %776 = vmatpush1.bf16.msra.mxu0 %v770
      %777 = vmatprep.subr.bf16.mxu0 0
      %778 = vmatpush1.bf16.msra.mxu0 0
      %779 = vmatprep.subr.bf16.mxu0 0
      %780 = vmatpush1.bf16.msra.mxu0 0
      %781 = vmatprep.subr.bf16.mxu0 0
      %782 = vmatpush1.bf16.msra.mxu0 0
      %783 = vmatprep.subr.bf16.mxu0 0
      %784 = vmatpush1.bf16.msra.mxu0 0
      %785 = vmatprep.subr.bf16.mxu0 0
      %786 = vmatpush1.bf16.msra.mxu0 0
      %787 = vmatprep.subr.bf16.mxu0 0
      %788 = vmatpush1.bf16.msra.mxu0 0
      %789 = vmatprep.subr.bf16.mxu0 0
      %790 = vmatpush1.bf16.msra.mxu0 0
      %791 = vmatprep.subr.bf16.mxu0 0
      %792 = vmatpush1.bf16.msra.mxu0 0
      %793 = vmatprep.subr.bf16.mxu0 0
      %794 = vmatpush1.bf16.msra.mxu0 0
      %795 = vmatprep.subr.bf16.mxu0 0
      %796 = vmatpush1.bf16.msra.mxu0 0
      %797 = vmatprep.subr.bf16.mxu0 0
      %798 = vmatpush1.bf16.msra.mxu0 0
      %799 = vmatprep.subr.bf16.mxu0 0
      %800 = vmatpush1.bf16.msra.mxu0 0
      %801 = vmatprep.subr.bf16.mxu0 0
      %802 = vmatpush1.bf16.msra.mxu0 0
      %803 = vmatprep.subr.bf16.mxu0 0
      %804 = vmatpush1.bf16.msra.mxu0 0
      %805 = vmatprep.subr.bf16.mxu0 0
      %806 = vmatpush1.bf16.msra.mxu0 0
      %807 = vmatprep.mubr.bf16.mxu0 0
      %808 = vmatmul.mubr.bf16.gmra.mrb[0].mxu0 %v766
      %v809 = vpop.f32.mrb[0].mxu0
      %v810 = vadd.f32 %v762, %v809
      %v811 = vpop.f32.mrb[0].mxu0
      %v812 = vadd.f32 %v762, %v811
      %v813 = vpop.f32.mrb[0].mxu0
      %v814 = vpop.f32.mrb[0].mxu0
      %815 = vdwg.mxu0
      %v816 = vld [vmem:[%s9] sm:$0xff]
      %818 = vset.pattern.permute.xlu0 0
      %819 = vperm.xlu0 %818, %v816
      %v820 = vpop.permute.xlu0 %819
      %v822 = vmul.f32 %v820, %v530
      %v823 = vmul.f32 %v820, %v532
      %v824 = vadd.f32 %v810, %v822
      %v825 = vadd.f32 %v812, %v823
      %v826 = vmax.f32 %v824, 0.0
      %v827 = vmax.f32 %v825, 0.0
      %828 = vst [vmem:[%s428] sm:$0xff] %v826
      %829 = vst [vmem:[%s428 + $0x8] sm:$0xff] %v827
      %s830 = smul.u32 2, %s25
      %p831 = scmp.lt.s32.totalorder %s26, 1
      %s832 = scalar_select %p831, %s26, 1
      %p833 = scmp.lt.s32.totalorder %s830, 1
      %s834 = scalar_select %p833, %s830, 1
      %s835 = smul.addr %s832, 2
      %s836 = sadd.s32 %s834, %s835
      %s837 = smul.addr %s836, 8
      %s838 = scalar_lea.vmem %s10, %s837
      // Predicated region
      $region61: #{dasi_forward.1} parent=59 // pred_check
        %p839 = pneg %p277
      $region62: #{dasi_forward.1} parent=59 // pred_check_branch
        %841 = sbr.rel (%p839) target = $region64
      $region63: #{dasi_forward.1} parent=59 // pred_region
        %s842 = smul.u32 2, %s25
      $region64: #{dasi_forward.1} parent=59 // pred_fallthru
        _
    $region60: #{dasi_forward.1} parent=5 // pred_fallthru
      _
    %p843 = scmp.le.s32.totalorder 2, %s16
    // Predicated region
    $region65: #{dasi_forward.1} parent=5 // pred_check
      %p844 = pneg %p843
    $region66: #{dasi_forward.1} parent=5 // pred_check_branch
      %846 = sbr.rel (%p844) target = $region68
    $region67: #{dasi_forward.1} parent=5 // pred_region
      %s847 = ssub.s32 %s16, 2
      // Predicated region
      $region69: #{dasi_forward.1} parent=67 // pred_check
        %p848 = pneg %p283
      $region70: #{dasi_forward.1} parent=67 // pred_check_branch
        %850 = sbr.rel (%p848) target = $region72
      $region71: #{dasi_forward.1} parent=67 // pred_region
        %s851 = smul.u32 2, %s27
        %p852 = scmp.lt.s32.totalorder %s28, 1
        %s853 = scalar_select %p852, %s28, 1
        %p854 = scmp.lt.s32.totalorder %s851, 1
        %s855 = scalar_select %p854, %s851, 1
        %s856 = smul.addr %s853, 2
        %s857 = sadd.s32 %s855, %s856
        %s858 = smul.addr %s857, 8
        %s859 = scalar_lea.vmem %s10, %s858
      $region72: #{dasi_forward.1} parent=67 // pred_fallthru
        _
    $region68: #{dasi_forward.1} parent=5 // pred_fallthru
      _
  $region6: #{dasi_forward.1} parent=0 // loop_footer
    %s20 = sadd.s32 1, %s16
  $region7: #{dasi_forward.1} parent=0 // loop_footer_branch
    %15 = sbr.rel target = $region3
  $region8: #{dasi_forward.1} parent=0 // loop_exit
    _

</llo_original>
